<compile_context>
chip_gen: v5e
topology: v5e:2x2
jax: 0.10.0
libtpu: 0.0.40
codegen_flags: <defaults>
</compile_context>

<pallas_src>
import functools

import jax
import jax.numpy as jnp
from jax import lax
from jax.experimental import pallas as pl
from jax.experimental.pallas import tpu as pltpu


# --------------------------------- helpers ---------------------------------
def _round_up(x, m):
    return -(-x // m) * m


def _pick_tile(n, target, align):
    """Tile for an axis of extent `n`: <= target, multiple of `align` (or the
    full extent when n <= target).  Prefers a divisor of n (no tail tile);
    otherwise returns the aligned target and the caller uses a cdiv grid with
    an in-kernel tail mask (no more full-vocab fallback blocks)."""
    if n <= target:
        return n
    t = max((target // align) * align, align)
    d = t
    while d >= align:
        if n % d == 0 and 2 * d >= t:
            return d
        d -= align
    return t


def _block_bytes(shape, dtype):
    """Approximate VMEM footprint of one buffer (last two dims padded to the
    (8, 128) sublane/lane tile)."""
    shape = list(shape)
    if len(shape) >= 1:
        shape[-1] = _round_up(shape[-1], 128)
    if len(shape) >= 2:
        shape[-2] = _round_up(shape[-2], 8)
    n = 1
    for d in shape:
        n *= int(d)
    return n * jnp.dtype(dtype).itemsize


def _vmem_limit(buffer_bytes):
    """Scoped-VMEM limit from the actual buffer math + headroom for Mosaic's
    internal scratch; floored/capped to stay sane across v5e/v6e/v7x."""
    return int(min(max(1.5 * buffer_bytes + (2 << 20), 16 << 20), 96 << 20))


# ------------------------- MLE (cross-entropy) kernel -----------------------
def _mle_kernel(logits_ref, labels_ref, sum_ref, cnt_ref, m_sc, l_sc, g_sc, *,
                pad_token_id, ts, tv, s_extent, v_extent,
                need_s_tail, need_v_tail):
    s = pl.program_id(1)
    v = pl.program_id(2)
    nv = pl.num_programs(2)

    # reset per-(b, s-tile) online-LSE state on the first vocab tile
    @pl.when(v == 0)
    def _():
        m_sc[...] = jnp.full_like(m_sc, -jnp.inf)
        l_sc[...] = jnp.zeros_like(l_sc)
        g_sc[...] = jnp.zeros_like(g_sc)

    x = logits_ref[0].astype(jnp.float32)                     # (TS, TV)
    lab = labels_ref[0]                                       # (TS, 1) int32

    # tile-local column index (loop-invariant; no per-tile "+ v*TV" add)
    col = lax.broadcasted_iota(jnp.int32, x.shape, 1)

    if need_v_tail:
        # cdiv vocab grid: OOB columns of the last tile hold unspecified data;
        # push them to a finite -1e30 so an all-padded tile cannot NaN the LSE.
        x = jnp.where(col < (v_extent - v * tv), x, -1e30)

    # streaming (online) log-sum-exp over vocab tiles
    m_prev = m_sc[...]
    m_new = jnp.maximum(m_prev, jnp.max(x, axis=-1, keepdims=True))
    l_sc[...] = (l_sc[...] * jnp.exp(m_prev - m_new)
                 + jnp.sum(jnp.exp(x - m_new), axis=-1, keepdims=True))
    m_sc[...] = m_new

    # fused gold-logit gather: local iota vs. tile-local label (cheap (TS,1) sub)
    lab_local = lab - v * tv
    g_sc[...] = g_sc[...] + jnp.sum(jnp.where(col == lab_local, x, 0.0),
                                    axis=-1, keepdims=True)

    @pl.when(v == nv - 1)
    def _():
        lse = m_sc[...] + jnp.log(l_sc[...])                  # (TS, 1)
        nll = lse - g_sc[...]                                 # (TS, 1)
        # CrossEntropyLoss(ignore_index=pad_token_id) semantics; the jnp.where
        # also keeps any out-of-range ignore index (e.g. -100) harmless.
        valid = lab != pad_token_id
        if need_s_tail:
            row = lax.broadcasted_iota(jnp.int32, lab.shape, 0)
            valid = valid & (row < (s_extent - s * ts))
        sum_ref[...] = jnp.zeros_like(sum_ref) + jnp.sum(jnp.where(valid, nll, 0.0))
        cnt_ref[...] = jnp.zeros_like(cnt_ref) + jnp.sum(valid.astype(jnp.float32))


# ------------------------ contrastive (SimCTG) kernel -----------------------
def _cl_kernel(hqt_ref, hk_ref, idq_ref, idk_ref, num_ref, den_ref, nrqt_sc, *,
               margin, pad_token_id, tk, s_extent, need_k_tail):
    kt = pl.program_id(1)

    @pl.when(kt == 0)
    def _():
        num_ref[...] = jnp.zeros_like(num_ref)
        den_ref[...] = jnp.zeros_like(den_ref)
        # normalize the per-batch (D, S) query block once, cache bf16 for MXU
        hqt = hqt_ref[0].astype(jnp.float32)                  # (D, S)
        inv_q = lax.rsqrt(jnp.sum(hqt * hqt, axis=0, keepdims=True))
        nrqt_sc[...] = (hqt * inv_q).astype(nrqt_sc.dtype)

    # normalize this key tile (f32 VPU math; bf16 only as the MXU operand)
    hk = hk_ref[0].astype(jnp.float32)                        # (TK, D)
    inv_k = lax.rsqrt(jnp.sum(hk * hk, axis=-1, keepdims=True))
    nrk = (hk * inv_k).astype(jnp.bfloat16)

    mask_k = (idk_ref[0] != pad_token_id).astype(jnp.float32)  # (TK, 1)
    if need_k_tail:
        row = lax.broadcasted_iota(jnp.int32, (nrk.shape[0], 1), 0)
        in_bounds = row < (s_extent - kt * tk)
        mask_k = mask_k * in_bounds.astype(jnp.float32)
        nrk = jnp.where(in_bounds, nrk, jnp.zeros_like(nrk))   # kill garbage rows

    # (TK, S) cosine-score tile: NN matmul (lhs contracts lanes, pre-transposed
    # query operand contracts sublanes) -> no per-tile key transpose on the XLU.
    scores = lax.dot_general(nrk, nrqt_sc[...],
                             dimension_numbers=(((1,), (0,)), ((), ())),
                             preferred_element_type=jnp.float32)

    mask_q = (idq_ref[0] != pad_token_id).astype(jnp.float32)  # (1, S)

    # gold (diagonal) score of a unit-norm row is exactly 1 in exact arithmetic:
    #   loss_ij = relu(margin - (gold_i - score_ij)) = relu(margin - 1 + score_ij)
    loss = jnp.maximum(margin - 1.0 + scores, 0.0)             # (TK, S)
    pair_mask = mask_k * mask_q                                # (TK, S)

    # Accumulate over ALL (i, j) pairs, then remove the diagonal analytically:
    # diagonal loss == relu(margin) == margin (margin >= 0) and its mask weight
    # is mask_k[i] (mask_q at the diagonal column equals mask_k).  This drops
    # the two (TK, S) iotas + compare of an explicit "not diagonal" mask.
    # NOTE: the reference subtracts the *computed* diagonal score; with bf16
    # MXU operands |score_ii - 1| <~ 1e-2, which is covered by the tolerance.
    diag_cnt = jnp.sum(mask_k)
    num_ref[...] = num_ref[...] + (jnp.sum(loss * pair_mask) - margin * diag_cnt)
    den_ref[...] = den_ref[...] + (jnp.sum(pair_mask) - diag_cnt)


# --------------------------------- wrapper ----------------------------------
def simctg_loss(last_hidden_states, logits, input_ids, labels, *,
                margin, vocab_size, pad_token_id):
    B, S, D = last_hidden_states.shape
    V = logits.shape[-1]
    assert V == vocab_size
    assert logits.shape == (B, S, V)
    assert input_ids.shape == (B, S) and labels.shape == (B, S)
    assert float(margin) >= 0.0

    lab3 = labels.astype(jnp.int32)[..., None]            # (B, S, 1)
    ids_key = input_ids.astype(jnp.int32)[..., None]      # (B, S, 1) key-tile mask
    ids_qry = input_ids.astype(jnp.int32)[:, None, :]     # (B, 1, S) query mask (lanes)
    # Pre-transposed queries: the CL score tile becomes a plain NN matmul with
    # no per-tile transpose.  One-time HBM transpose, tiny vs. the logits stream.
    hid_t = jnp.swapaxes(last_hidden_states, 1, 2)         # (B, D, S)

    # ------------------------------ tiles ------------------------------
    log_isz = jnp.dtype(logits.dtype).itemsize
    TS = _pick_tile(S, 512, 8)
    tv_target = max(128, (8 * 1024 * 1024) // max(TS * log_isz, 1))  # ~8 MiB/buffer
    TV = _pick_tile(V, tv_target, 128)
    TK = _pick_tile(S, 512, 128)

    Sg = pl.cdiv(S, TS)
    Vg = pl.cdiv(V, TV)
    Kg = pl.cdiv(S, TK)

    # ---------------- MLE (cross-entropy, ignore_index = pad) ----------------
    mle_vmem = (2 * _block_bytes((TS, TV), logits.dtype)
                + 2 * _block_bytes((TS, 1), jnp.int32)
                + 4 * _block_bytes((1, 1), jnp.float32)
                + 3 * _block_bytes((TS, 1), jnp.float32))
    mle_out_shape = (jax.ShapeDtypeStruct((B * Sg, 1, 1), jnp.float32),
                     jax.ShapeDtypeStruct((B * Sg, 1, 1), jnp.float32))
    mle_out_map = lambda b, s, v: (b * Sg + s, 0, 0)   # per-(b, s-tile) partials

    mle_sum, mle_cnt = pl.pallas_call(
        functools.partial(_mle_kernel, pad_token_id=pad_token_id, ts=TS, tv=TV,
                          s_extent=S, v_extent=V,
                          need_s_tail=(S % TS != 0), need_v_tail=(V % TV != 0)),
        out_shape=mle_out_shape,
        grid_spec=pltpu.PrefetchScalarGridSpec(
            num_scalar_prefetch=0,
            grid=(B, Sg, Vg),
            in_specs=[pl.BlockSpec((1, TS, TV), lambda b, s, v: (b, s, v)),
                      # labels block index is independent of v -> stays resident
                      pl.BlockSpec((1, TS, 1), lambda b, s, v: (b, s, 0))],
            out_specs=(pl.BlockSpec((1, 1, 1), mle_out_map),
                       pl.BlockSpec((1, 1, 1), mle_out_map)),
            scratch_shapes=[pltpu.VMEM((TS, 1), jnp.float32),
                            pltpu.VMEM((TS, 1), jnp.float32),
                            pltpu.VMEM((TS, 1), jnp.float32)]),
        compiler_params=pltpu.CompilerParams(
            dimension_semantics=("parallel", "parallel", "arbitrary"),
            vmem_limit_bytes=_vmem_limit(mle_vmem)),
    )(logits, lab3)

    # ------------------------- contrastive (SimCTG) -------------------------
    cl_vmem = (2 * _block_bytes((D, S), hid_t.dtype)
               + 2 * _block_bytes((TK, D), last_hidden_states.dtype)
               + 2 * _block_bytes((1, S), jnp.int32)
               + 2 * _block_bytes((TK, 1), jnp.int32)
               + 4 * _block_bytes((1, 1), jnp.float32)
               + _block_bytes((D, S), jnp.bfloat16))
    cl_out_shape = (jax.ShapeDtypeStruct((B, 1, 1), jnp.float32),
                    jax.ShapeDtypeStruct((B, 1, 1), jnp.float32))

    cl_num, cl_den = pl.pallas_call(
        functools.partial(_cl_kernel, margin=float(margin),
                          pad_token_id=pad_token_id, tk=TK, s_extent=S,
                          need_k_tail=(S % TK != 0)),
        out_shape=cl_out_shape,
        grid_spec=pltpu.PrefetchScalarGridSpec(
            num_scalar_prefetch=0,
            grid=(B, Kg),
            in_specs=[pl.BlockSpec((1, D, S), lambda b, k: (b, 0, 0)),   # queries^T
                      pl.BlockSpec((1, TK, D), lambda b, k: (b, k, 0)),  # key tile
                      pl.BlockSpec((1, 1, S), lambda b, k: (b, 0, 0)),   # query mask
                      pl.BlockSpec((1, TK, 1), lambda b, k: (b, k, 0))], # key mask
            out_specs=(pl.BlockSpec((1, 1, 1), lambda b, k: (b, 0, 0)),
                       pl.BlockSpec((1, 1, 1), lambda b, k: (b, 0, 0))),
            scratch_shapes=[pltpu.VMEM((D, S), jnp.bfloat16)]),
        compiler_params=pltpu.CompilerParams(
            dimension_semantics=("parallel", "arbitrary"),
            vmem_limit_bytes=_vmem_limit(cl_vmem)),
    )(hid_t, last_hidden_states, ids_qry, ids_key)

    mle_loss = jnp.sum(mle_sum) / jnp.sum(mle_cnt)
    cl_loss = jnp.sum(cl_num) / jnp.sum(cl_den)
    return mle_loss, cl_loss


# --------------------------- pure-JAX reference -----------------------------
def _reference(hidden, logits, input_ids, labels, margin, pad):
    logp = jax.nn.log_softmax(logits.astype(jnp.float32), axis=-1)
    gold = jnp.take_along_axis(logp, labels[..., None], axis=-1)[..., 0]
    valid = (labels != pad).astype(jnp.float32)
    mle = -(gold * valid).sum() / valid.sum()

    hidden = hidden.astype(jnp.float32)
    norm_rep = hidden / jnp.linalg.norm(hidden, axis=2, keepdims=True)
    scores = jnp.einsum('bsd,btd->bst', norm_rep, norm_rep)
    gold_s = jnp.diagonal(scores, axis1=1, axis2=2)[..., None]
    loss_m = jax.nn.relu(margin - (gold_s - scores))
    im = (input_ids != pad).astype(jnp.float32)
    S = input_ids.shape[1]
    base = 1.0 - jnp.eye(S, dtype=jnp.float32)
    lm = base[None] * im[:, :, None] * im[:, None, :]
    row = (loss_m * lm).sum(-1) * im
    cl = row.sum() / lm.sum()
    return mle, cl


if __name__ == "__main__":
    # SimCTGLoss.__init__ hyper-parameters
    margin = 1.0
    vocab_size = 32
    pad_token_id = 0

    B, S, D, V = 2, 8, 32, vocab_size
    key = jax.random.PRNGKey(0)
    k1, k2, k3, k4 = jax.random.split(key, 4)
    hidden = jax.random.normal(k1, (B, S, D), dtype=jnp.float32)
    logits = jax.random.normal(k2, (B, S, V), dtype=jnp.float32)
    input_ids = jax.random.randint(k3, (B, S), 1, V, dtype=jnp.int32)
    labels = jax.random.randint(k4, (B, S), 1, V, dtype=jnp.int32)
    # deterministic padding so the ignore/pad masking paths are exercised
    input_ids = input_ids.at[:, -2:].set(pad_token_id)
    labels = labels.at[:, -3:].set(pad_token_id)

    mle, cl = simctg_loss(hidden, logits, input_ids, labels,
                          margin=margin, vocab_size=vocab_size,
                          pad_token_id=pad_token_id)
    jax.block_until_ready((mle, cl))
    ref_mle, ref_cl = _reference(hidden, logits, input_ids, labels, margin, pad_token_id)
    assert jnp.allclose(mle, ref_mle, rtol=1e-4, atol=1e-4), (mle, ref_mle)
    # CL uses bf16 MXU operands (f32 accumulate) + exact gold score of 1.0
    assert jnp.allclose(cl, ref_cl, rtol=2e-2, atol=1e-2), (cl, ref_cl)

    # bf16 inputs halve the HBM logits stream; LSE math stays f32 in-kernel
    mle16, cl16 = simctg_loss(hidden.astype(jnp.bfloat16), logits.astype(jnp.bfloat16),
                              input_ids, labels, margin=margin,
                              vocab_size=vocab_size, pad_token_id=pad_token_id)
    jax.block_until_ready((mle16, cl16))
    assert jnp.allclose(mle16, ref_mle, rtol=5e-2, atol=5e-2), (mle16, ref_mle)
    assert jnp.allclose(cl16, ref_cl, rtol=1e-1, atol=5e-2), (cl16, ref_cl)

    # non-divisible shapes exercise the cdiv-grid + in-kernel tail-mask path
    B2, S2, D2, V2 = 1, 520, 32, 4500
    kk = jax.random.split(jax.random.PRNGKey(1), 4)
    hidden2 = jax.random.normal(kk[0], (B2, S2, D2), dtype=jnp.float32)
    logits2 = jax.random.normal(kk[1], (B2, S2, V2), dtype=jnp.float32)
    ids2 = jax.random.randint(kk[2], (B2, S2), 1, V2, dtype=jnp.int32)
    labels2 = jax.random.randint(kk[3], (B2, S2), 1, V2, dtype=jnp.int32)
    ids2 = ids2.at[:, -5:].set(pad_token_id)
    labels2 = labels2.at[:, -7:].set(pad_token_id)
    mle2, cl2 = simctg_loss(hidden2, logits2, ids2, labels2, margin=margin,
                            vocab_size=V2, pad_token_id=pad_token_id)
    jax.block_until_ready((mle2, cl2))
    ref_mle2, ref_cl2 = _reference(hidden2, logits2, ids2, labels2, margin, pad_token_id)
    assert jnp.allclose(mle2, ref_mle2, rtol=1e-3, atol=1e-3), (mle2, ref_mle2)
    assert jnp.allclose(cl2, ref_cl2, rtol=5e-2, atol=1e-2), (cl2, ref_cl2)

    print("KERNEL_OK")
</pallas_src>

<mosaic_0001>
module attributes {stable_mosaic.version = 11 : i64} {
  func.func @_mle_kernel(%arg0: i32, %arg1: i32, %arg2: i32, %arg3: memref<1x8x32xf32, #tpu.memory_space<vmem>>, %arg4: memref<1x8x1xi32, #tpu.memory_space<vmem>>, %arg5: memref<1x1x1xf32, #tpu.memory_space<vmem>>, %arg6: memref<1x1x1xf32, #tpu.memory_space<vmem>>, %arg7: memref<8x1xf32, #tpu.memory_space<vmem>>, %arg8: memref<8x1xf32, #tpu.memory_space<vmem>>, %arg9: memref<8x1xf32, #tpu.memory_space<vmem>>) attributes {dimension_semantics = [#tpu.dimension_semantics<parallel>, #tpu.dimension_semantics<parallel>, #tpu.dimension_semantics<arbitrary>], iteration_bounds = array<i64: 2, 1, 1>, scalar_prefetch = 0 : i64, scratch_operands = 3 : i64, tpu.core_type = #tpu.core_type<tc>, window_params = [{transform_indices = @transform_0, window_bounds = array<i64: 1, 8, 32>}, {transform_indices = @transform_1, window_bounds = array<i64: 1, 8, 1>}, {transform_indices = @transform_2, window_bounds = array<i64: 1, 1, 1>}, {transform_indices = @transform_3, window_bounds = array<i64: 1, 1, 1>}]} {
    %c0_i32 = arith.constant 0 : i32
    %0 = arith.cmpi eq, %arg2, %c0_i32 : i32
    %1 = arith.extui %0 : i1 to i32
    %c0_i32_0 = arith.constant 0 : i32
    %2 = arith.cmpi ne, %1, %c0_i32_0 : i32
    scf.if %2 {
      %cst_23 = arith.constant 0xFF800000 : f32
      %39 = vector.broadcast %cst_23 : f32 to vector<8x1xf32>
      %c0_24 = arith.constant 0 : index
      %c0_25 = arith.constant 0 : index
      %40 = vector.load %arg7[%c0_24, %c0_25] : memref<8x1xf32, #tpu.memory_space<vmem>>, vector<8x1xf32>
      tpu.vector_store %arg7[%c0_24, %c0_25], %39 {strides = array<i32>} : memref<8x1xf32, #tpu.memory_space<vmem>>, vector<8x1xf32>,
      %cst_26 = arith.constant 0.000000e+00 : f32
      %41 = vector.broadcast %cst_26 : f32 to vector<8x1xf32>
      %c0_27 = arith.constant 0 : index
      %c0_28 = arith.constant 0 : index
      %42 = vector.load %arg8[%c0_27, %c0_28] : memref<8x1xf32, #tpu.memory_space<vmem>>, vector<8x1xf32>
      tpu.vector_store %arg8[%c0_27, %c0_28], %41 {strides = array<i32>} : memref<8x1xf32, #tpu.memory_space<vmem>>, vector<8x1xf32>,
      %cst_29 = arith.constant 0.000000e+00 : f32
      %43 = vector.broadcast %cst_29 : f32 to vector<8x1xf32>
      %c0_30 = arith.constant 0 : index
      %c0_31 = arith.constant 0 : index
      %44 = vector.load %arg9[%c0_30, %c0_31] : memref<8x1xf32, #tpu.memory_space<vmem>>, vector<8x1xf32>
      tpu.vector_store %arg9[%c0_30, %c0_31], %43 {strides = array<i32>} : memref<8x1xf32, #tpu.memory_space<vmem>>, vector<8x1xf32>,
    } else {
    }
    %c0 = arith.constant 0 : index
    %c0_1 = arith.constant 0 : index
    %c0_2 = arith.constant 0 : index
    %3 = vector.load %arg3[%c0, %c0_1, %c0_2] : memref<1x8x32xf32, #tpu.memory_space<vmem>>, vector<1x8x32xf32>
    %4 = vector.shape_cast %3 : vector<1x8x32xf32> to vector<8x32xf32>
    %c0_3 = arith.constant 0 : index
    %c0_4 = arith.constant 0 : index
    %c0_5 = arith.constant 0 : index
    %5 = vector.load %arg4[%c0_3, %c0_4, %c0_5] : memref<1x8x1xi32, #tpu.memory_space<vmem>>, vector<1x8x1xi32>
    %6 = vector.shape_cast %5 : vector<1x8x1xi32> to vector<8x1xi32>
    %7 = tpu.iota {dimensions = array<i32: 1>} : vector<8x32xi32>
    %c0_6 = arith.constant 0 : index
    %c0_7 = arith.constant 0 : index
    %8 = vector.load %arg7[%c0_6, %c0_7] : memref<8x1xf32, #tpu.memory_space<vmem>>, vector<8x1xf32>
    %cst = arith.constant dense<0xFF800000> : vector<8xf32>
    %9 = vector.multi_reduction <maximumf>, %4, %cst [1] : vector<8x32xf32> to vector<8xf32>
    %10 = vector.shape_cast %9 : vector<8xf32> to vector<8x1xf32>
    %11 = arith.maximumf %8, %10 : vector<8x1xf32>
    %c0_8 = arith.constant 0 : index
    %c0_9 = arith.constant 0 : index
    %12 = vector.load %arg8[%c0_8, %c0_9] : memref<8x1xf32, #tpu.memory_space<vmem>>, vector<8x1xf32>
    %13 = arith.subf %8, %11 : vector<8x1xf32>
    %14 = math.exp %13 : vector<8x1xf32>
    %15 = arith.mulf %12, %14 : vector<8x1xf32>
    %16 = vector.broadcast %11 : vector<8x1xf32> to vector<8x32xf32>
    %17 = arith.subf %4, %16 : vector<8x32xf32>
    %18 = math.exp %17 : vector<8x32xf32>
    %cst_10 = arith.constant dense<0.000000e+00> : vector<8xf32>
    %19 = vector.multi_reduction <add>, %18, %cst_10 [1] : vector<8x32xf32> to vector<8xf32>
    %20 = vector.shape_cast %19 : vector<8xf32> to vector<8x1xf32>
    %21 = arith.addf %15, %20 : vector<8x1xf32>
    %c0_11 = arith.constant 0 : index
    %c0_12 = arith.constant 0 : index
    %22 = vector.load %arg8[%c0_11, %c0_12] : memref<8x1xf32, #tpu.memory_space<vmem>>, vector<8x1xf32>
    tpu.vector_store %arg8[%c0_11, %c0_12], %21 {strides = array<i32>} : memref<8x1xf32, #tpu.memory_space<vmem>>, vector<8x1xf32>,
    %c0_13 = arith.constant 0 : index
    %c0_14 = arith.constant 0 : index
    %23 = vector.load %arg7[%c0_13, %c0_14] : memref<8x1xf32, #tpu.memory_space<vmem>>, vector<8x1xf32>
    tpu.vector_store %arg7[%c0_13, %c0_14], %11 {strides = array<i32>} : memref<8x1xf32, #tpu.memory_space<vmem>>, vector<8x1xf32>,
    %c32_i32 = arith.constant 32 : i32
    %24 = arith.muli %arg2, %c32_i32 : i32
    %25 = vector.broadcast %24 : i32 to vector<8x1xi32>
    %26 = arith.subi %6, %25 : vector<8x1xi32>
    %c0_15 = arith.constant 0 : index
    %c0_16 = arith.constant 0 : index
    %27 = vector.load %arg9[%c0_15, %c0_16] : memref<8x1xf32, #tpu.memory_space<vmem>>, vector<8x1xf32>
    %28 = vector.broadcast %26 : vector<8x1xi32> to vector<8x32xi32>
    %29 = arith.cmpi eq, %7, %28 : vector<8x32xi32>
    %cst_17 = arith.constant 0.000000e+00 : f32
    %30 = vector.broadcast %cst_17 : f32 to vector<8x32xf32>
    %31 = arith.select %29, %4, %30 : vector<8x32xi1>, vector<8x32xf32>
    %cst_18 = arith.constant dense<0.000000e+00> : vector<8xf32>
    %32 = vector.multi_reduction <add>, %31, %cst_18 [1] : vector<8x32xf32> to vector<8xf32>
    %33 = vector.shape_cast %32 : vector<8xf32> to vector<8x1xf32>
    %34 = arith.addf %27, %33 : vector<8x1xf32>
    %c0_19 = arith.constant 0 : index
    %c0_20 = arith.constant 0 : index
    %35 = vector.load %arg9[%c0_19, %c0_20] : memref<8x1xf32, #tpu.memory_space<vmem>>, vector<8x1xf32>
    tpu.vector_store %arg9[%c0_19, %c0_20], %34 {strides = array<i32>} : memref<8x1xf32, #tpu.memory_space<vmem>>, vector<8x1xf32>,
    %c0_i32_21 = arith.constant 0 : i32
    %36 = arith.cmpi eq, %arg2, %c0_i32_21 : i32
    %37 = arith.extui %36 : i1 to i32
    %c0_i32_22 = arith.constant 0 : i32
    %38 = arith.cmpi ne, %37, %c0_i32_22 : i32
    scf.if %38 {
      %c0_23 = arith.constant 0 : index
      %c0_24 = arith.constant 0 : index
      %39 = vector.load %arg7[%c0_23, %c0_24] : memref<8x1xf32, #tpu.memory_space<vmem>>, vector<8x1xf32>
      %c0_25 = arith.constant 0 : index
      %c0_26 = arith.constant 0 : index
      %40 = vector.load %arg8[%c0_25, %c0_26] : memref<8x1xf32, #tpu.memory_space<vmem>>, vector<8x1xf32>
      %41 = math.log %40 : vector<8x1xf32>
      %42 = arith.addf %39, %41 : vector<8x1xf32>
      %c0_27 = arith.constant 0 : index
      %c0_28 = arith.constant 0 : index
      %43 = vector.load %arg9[%c0_27, %c0_28] : memref<8x1xf32, #tpu.memory_space<vmem>>, vector<8x1xf32>
      %44 = arith.subf %42, %43 : vector<8x1xf32>
      %c0_i32_29 = arith.constant 0 : i32
      %45 = vector.broadcast %c0_i32_29 : i32 to vector<8x1xi32>
      %46 = arith.cmpi ne, %6, %45 : vector<8x1xi32>
      %cst_30 = arith.constant 0.000000e+00 : f32
      %47 = vector.broadcast %cst_30 : f32 to vector<1x1x1xf32>
      %cst_31 = arith.constant 0.000000e+00 : f32
      %48 = vector.broadcast %cst_31 : f32 to vector<8x1xf32>
      %49 = arith.select %46, %44, %48 : vector<8x1xi1>, vector<8x1xf32>
      %50 = vector.shape_cast %49 : vector<8x1xf32> to vector<1x8x1xf32>
      %cst_32 = arith.constant dense<0.000000e+00> : vector<1xf32>
      %51 = vector.multi_reduction <add>, %50, %cst_32 [1, 2] : vector<1x8x1xf32> to vector<1xf32>
      %52 = vector.shape_cast %51 : vector<1xf32> to vector<1x1x1xf32>
      %53 = vector.extract %52[0, 0, 0] : f32 from vector<1x1x1xf32>
      %54 = vector.broadcast %53 : f32 to vector<1x1x1xf32>
      %55 = arith.addf %47, %54 : vector<1x1x1xf32>
      %c0_33 = arith.constant 0 : index
      %c0_34 = arith.constant 0 : index
      %c0_35 = arith.constant 0 : index
      %56 = vector.load %arg5[%c0_33, %c0_34, %c0_35] : memref<1x1x1xf32, #tpu.memory_space<vmem>>, vector<1x1x1xf32>
      tpu.vector_store %arg5[%c0_33, %c0_34, %c0_35], %55 {strides = array<i32>} : memref<1x1x1xf32, #tpu.memory_space<vmem>>, vector<1x1x1xf32>,
      %cst_36 = arith.constant 0.000000e+00 : f32
      %57 = vector.broadcast %cst_36 : f32 to vector<1x1x1xf32>
      %58 = arith.extui %46 : vector<8x1xi1> to vector<8x1xi32>
      %59 = arith.sitofp %58 : vector<8x1xi32> to vector<8x1xf32>
      %60 = vector.shape_cast %59 : vector<8x1xf32> to vector<1x8x1xf32>
      %cst_37 = arith.constant dense<0.000000e+00> : vector<1xf32>
      %61 = vector.multi_reduction <add>, %60, %cst_37 [1, 2] : vector<1x8x1xf32> to vector<1xf32>
      %62 = vector.shape_cast %61 : vector<1xf32> to vector<1x1x1xf32>
      %63 = vector.extract %62[0, 0, 0] : f32 from vector<1x1x1xf32>
      %64 = vector.broadcast %63 : f32 to vector<1x1x1xf32>
      %65 = arith.addf %57, %64 : vector<1x1x1xf32>
      %c0_38 = arith.constant 0 : index
      %c0_39 = arith.constant 0 : index
      %c0_40 = arith.constant 0 : index
      %66 = vector.load %arg6[%c0_38, %c0_39, %c0_40] : memref<1x1x1xf32, #tpu.memory_space<vmem>>, vector<1x1x1xf32>
      tpu.vector_store %arg6[%c0_38, %c0_39, %c0_40], %65 {strides = array<i32>} : memref<1x1x1xf32, #tpu.memory_space<vmem>>, vector<1x1x1xf32>,
    } else {
    }
    return
  }
  func.func @transform_0(%arg0: i32, %arg1: i32, %arg2: i32) -> (i32, i32, i32) {
    %c0_i32 = arith.constant 0 : i32
    return %arg0, %arg1, %arg2 : i32, i32, i32
  }
  func.func @transform_1(%arg0: i32, %arg1: i32, %arg2: i32) -> (i32, i32, i32) {
    %c0_i32 = arith.constant 0 : i32
    %c0_i32_0 = arith.constant 0 : i32
    return %arg0, %arg1, %c0_i32 : i32, i32, i32
  }
  func.func @transform_2(%arg0: i32, %arg1: i32, %arg2: i32) -> (i32, i32, i32) {
    %c1_i32 = arith.constant 1 : i32
    %0 = arith.muli %arg0, %c1_i32 : i32
    %1 = arith.addi %0, %arg1 : i32
    %c0_i32 = arith.constant 0 : i32
    %c0_i32_0 = arith.constant 0 : i32
    %c0_i32_1 = arith.constant 0 : i32
    return %1, %c0_i32, %c0_i32_0 : i32, i32, i32
  }
  func.func @transform_3(%arg0: i32, %arg1: i32, %arg2: i32) -> (i32, i32, i32) {
    %c1_i32 = arith.constant 1 : i32
    %0 = arith.muli %arg0, %c1_i32 : i32
    %1 = arith.addi %0, %arg1 : i32
    %c0_i32 = arith.constant 0 : i32
    %c0_i32_0 = arith.constant 0 : i32
    %c0_i32_1 = arith.constant 0 : i32
    return %1, %c0_i32, %c0_i32_0 : i32, i32, i32
  }
}

</mosaic_0001>

<llo_original>
// kernel: tpu_custom_call.1
$region0: #{tpu_custom_call.1}
  #allocation0 [shape = 'u32[]', space=smem, size = 0x4, offset = 0x4, fixed_abs, tag = 'smem constant byte address 0x4 - core index']
  #allocation1 [shape = 'u32[72,128]{1,0:T(1,128)}', space=vmem, size = 0x9000, scoped, tag = 'internal scratch']
  #allocation2 [shape = 'f32[8,1]{1,0:T(8,128)}', space=vmem, size = 0x1000, scoped, tag = 'scratch operand']
  #allocation3 [shape = 'f32[8,1]{1,0:T(8,128)}', space=vmem, size = 0x1000, scoped, tag = 'scratch operand']
  #allocation4 [shape = 'f32[8,1]{1,0:T(8,128)}', space=vmem, size = 0x1000, scoped, tag = 'scratch operand']
  %s0 = inlined_call_operand.vmem [shape: f32[2,8,32], index: 0, kind: input, shape index: {}]
  %s1 = inlined_call_operand.vmem [shape: s32[2,8,1], index: 1, kind: input, shape index: {}]
  %s2 = inlined_call_operand.vmem [shape: f32[2,1,1], index: 2, kind: output, shape index: {0}]
  %s3 = inlined_call_operand.vmem [shape: f32[2,1,1], index: 3, kind: output, shape index: {1}]
  %4 = xla_tuple %s2, %s3
  %s5 = sld [smem:[#allocation0]]
  $region57: #{tpu_custom_call.1} parent=0
    _
  %s7 = ssub.s32 1, %s5
  %s8 = scalar_select 0, %s7, %s5
  loop: start=0, step=1, limit=4
  $region2: #{tpu_custom_call.1} parent=0 // loop_pre_header
    _
  $region3: #{tpu_custom_call.1} parent=0 // loop_header
    %s10 = sphi 0, %s14
    %p11 = scmp.ge.s32.totalorder %s10, 4
    %s17 = sphi 0, %s36
    %s18 = sphi 0, %s32
    %s19 = sphi 0, %s28
    %s20 = sphi 0, %s17
    %s21 = sphi 0, %s18
    %s22 = sphi 0, %s19
    %s23 = sphi 0, %s20
    %s24 = sphi 0, %s21
    %s25 = sphi 0, %s22
    %s43 = sphi 0, %s45
    %s46 = sphi 0, %s43
    %s47 = sphi 0, %s46
    %s63 = sphi 0, %s47
    %s71 = sphi 0, %s73
    %s74 = sphi 0, %s71
    %s75 = sphi 0, %s74
    %s91 = sphi 0, %s75
    %s99 = sphi 0, %s101
    %s102 = sphi 0, %s99
    %s103 = sphi 0, %s102
    %s119 = sphi 0, %s103
    %s127 = sphi 0, %s129
    %s130 = sphi 0, %s127
    %s131 = sphi 0, %s130
    %s147 = sphi 0, %s131
  $region4: #{tpu_custom_call.1} parent=0 // loop_header_branch
    %13 = sbr.rel (%p11) target = $region8
  $region5: #{tpu_custom_call.1} parent=0 // loop_body
    %s15 = ssub.s32 %s10, 1
    %s16 = ssub.s32 %s10, 2
    %s26 = sadd.s32 1, %s19
    %p27 = scmp.ge.s32.totalorder %s26, 1
    %s28 = scalar_select %p27, 0, %s26
    %s29 = sadd.s32 1, %s18
    %s30 = scalar_select %p27, %s29, %s18
    %p31 = scmp.ge.s32.totalorder %s30, 1
    %s32 = scalar_select %p31, 0, %s30
    %s33 = sadd.s32 1, %s17
    %s34 = scalar_select %p31, %s33, %s17
    %p35 = scmp.ge.s32.totalorder %s34, 2
    %s36 = scalar_select %p35, 0, %s34
    %s37 = ssub.s32 %s17, %s36
    %s38 = ssub.s32 %s18, %s32
    %s39 = sor.u32 %s37, %s38
    %s40 = ssub.s32 %s19, %s28
    %s41 = sor.u32 %s39, %s40
    %p42 = scmp.eq.s32.totalorder %s41, 0
    %s44 = sadd.s32 %s43, 1
    %s45 = scalar_select %p42, %s43, %s44
    %p48 = pneg %p42
    %p49 = scmp.eq.s32.totalorder %s10, 1
    %p50 = por %p48, %p49
    %p51 = scmp.ne.s32.totalorder %s43, %s46
    %p52 = scmp.eq.s32.totalorder %s10, 0
    %p53 = por %p51, %p52
    %p54 = scmp.ne.s32.totalorder %s43, %s46
    %p55 = scmp.eq.s32.totalorder %s15, 1
    %p56 = por %p54, %p55
    %p57 = scmp.ne.s32.totalorder %s46, %s47
    %p58 = scmp.eq.s32.totalorder %s15, 0
    %p59 = por %p57, %p58
    %p60 = scmp.ne.s32.totalorder %s46, %s47
    %p61 = scmp.eq.s32.totalorder %s16, 1
    %p62 = por %p60, %p61
    %p64 = scmp.ne.s32.totalorder %s47, %s63
    %p65 = scmp.eq.s32.totalorder %s16, 0
    %p66 = por %p64, %p65
    %s67 = ssub.s32 %s17, %s36
    %s68 = ssub.s32 %s18, %s32
    %s69 = sor.u32 %s67, %s68
    %p70 = scmp.eq.s32.totalorder %s69, 0
    %s72 = sadd.s32 %s71, 1
    %s73 = scalar_select %p70, %s71, %s72
    %p76 = pneg %p70
    %p77 = scmp.eq.s32.totalorder %s10, 1
    %p78 = por %p76, %p77
    %p79 = scmp.ne.s32.totalorder %s71, %s74
    %p80 = scmp.eq.s32.totalorder %s10, 0
    %p81 = por %p79, %p80
    %p82 = scmp.ne.s32.totalorder %s71, %s74
    %p83 = scmp.eq.s32.totalorder %s15, 1
    %p84 = por %p82, %p83
    %p85 = scmp.ne.s32.totalorder %s74, %s75
    %p86 = scmp.eq.s32.totalorder %s15, 0
    %p87 = por %p85, %p86
    %p88 = scmp.ne.s32.totalorder %s74, %s75
    %p89 = scmp.eq.s32.totalorder %s16, 1
    %p90 = por %p88, %p89
    %p92 = scmp.ne.s32.totalorder %s75, %s91
    %p93 = scmp.eq.s32.totalorder %s16, 0
    %p94 = por %p92, %p93
    %s95 = sadd.s32 %s17, %s18
    %s96 = sadd.s32 %s36, %s32
    %s97 = ssub.s32 %s95, %s96
    %p98 = scmp.eq.s32.totalorder %s97, 0
    %s100 = sadd.s32 %s99, 1
    %s101 = scalar_select %p98, %s99, %s100
    %p104 = pneg %p98
    %p105 = scmp.eq.s32.totalorder %s10, 1
    %p106 = por %p104, %p105
    %p107 = scmp.ne.s32.totalorder %s99, %s102
    %p108 = scmp.eq.s32.totalorder %s10, 0
    %p109 = por %p107, %p108
    %p110 = scmp.ne.s32.totalorder %s99, %s102
    %p111 = scmp.eq.s32.totalorder %s15, 1
    %p112 = por %p110, %p111
    %p113 = scmp.ne.s32.totalorder %s102, %s103
    %p114 = scmp.eq.s32.totalorder %s15, 0
    %p115 = por %p113, %p114
    %p116 = scmp.ne.s32.totalorder %s102, %s103
    %p117 = scmp.eq.s32.totalorder %s16, 1
    %p118 = por %p116, %p117
    %p120 = scmp.ne.s32.totalorder %s103, %s119
    %p121 = scmp.eq.s32.totalorder %s16, 0
    %p122 = por %p120, %p121
    %s123 = sadd.s32 %s17, %s18
    %s124 = sadd.s32 %s36, %s32
    %s125 = ssub.s32 %s123, %s124
    %p126 = scmp.eq.s32.totalorder %s125, 0
    %s128 = sadd.s32 %s127, 1
    %s129 = scalar_select %p126, %s127, %s128
    %p132 = pneg %p126
    %p133 = scmp.eq.s32.totalorder %s10, 1
    %p134 = por %p132, %p133
    %p135 = scmp.ne.s32.totalorder %s127, %s130
    %p136 = scmp.eq.s32.totalorder %s10, 0
    %p137 = por %p135, %p136
    %p138 = scmp.ne.s32.totalorder %s127, %s130
    %p139 = scmp.eq.s32.totalorder %s15, 1
    %p140 = por %p138, %p139
    %p141 = scmp.ne.s32.totalorder %s130, %s131
    %p142 = scmp.eq.s32.totalorder %s15, 0
    %p143 = por %p141, %p142
    %p144 = scmp.ne.s32.totalorder %s130, %s131
    %p145 = scmp.eq.s32.totalorder %s16, 1
    %p146 = por %p144, %p145
    %p148 = scmp.ne.s32.totalorder %s131, %s147
    %p149 = scmp.eq.s32.totalorder %s16, 0
    %p150 = por %p148, %p149
    %p151 = scmp.le.s32.totalorder 1, %s10
    %p152 = scmp.lt.s32.totalorder %s10, 3
    %p153 = pnand %p151, %p152
    %p154 = pneg %p153
    // Predicated region
    $region9: #{tpu_custom_call.1} parent=5 // pred_check
      _
    $region10: #{tpu_custom_call.1} parent=5 // pred_check_branch
      %156 = sbr.rel (%p153) target = $region12
    $region11: #{tpu_custom_call.1} parent=5 // pred_region
      %s157 = ssub.s32 %s10, 1
    $region12: #{tpu_custom_call.1} parent=5 // pred_fallthru
      _
    %p158 = scmp.lt.s32.totalorder %s10, 2
    // Predicated region
    $region13: #{tpu_custom_call.1} parent=5 // pred_check
      %p159 = pneg %p158
    $region14: #{tpu_custom_call.1} parent=5 // pred_check_branch
      %161 = sbr.rel (%p159) target = $region16
    $region15: #{tpu_custom_call.1} parent=5 // pred_region
      // Predicated region
      $region17: #{tpu_custom_call.1} parent=15 // pred_check
        %p162 = pneg %p53
      $region18: #{tpu_custom_call.1} parent=15 // pred_check_branch
        %164 = sbr.rel (%p162) target = $region20
      $region19: #{tpu_custom_call.1} parent=15 // pred_region
        %p165 = scmp.lt.s32.totalorder %s17, 1
        %s166 = scalar_select %p165, %s17, 1
        %p167 = scmp.lt.s32.totalorder %s18, 0
        %s168 = scalar_select %p167, %s18, 0
        %p169 = scmp.lt.s32.totalorder %s19, 0
        %s170 = scalar_select %p169, %s19, 0
        %s171 = sadd.s32 %s170, %s168
        %s172 = sadd.s32 %s171, %s166
        %s173 = smul.addr %s172, 8
        %s174 = scalar_lea.vmem %s0, %s173
      $region20: #{tpu_custom_call.1} parent=15 // pred_fallthru
        _
      // Predicated region
      $region21: #{tpu_custom_call.1} parent=15 // pred_check
        %p175 = pneg %p81
      $region22: #{tpu_custom_call.1} parent=15 // pred_check_branch
        %177 = sbr.rel (%p175) target = $region24
      $region23: #{tpu_custom_call.1} parent=15 // pred_region
        %p178 = scmp.lt.s32.totalorder %s17, 1
        %s179 = scalar_select %p178, %s17, 1
        %p180 = scmp.lt.s32.totalorder %s18, 0
        %s181 = scalar_select %p180, %s18, 0
        %s182 = sadd.s32 %s181, %s179
        %s183 = smul.addr %s182, 8
        %s184 = scalar_lea.vmem %s1, %s183
      $region24: #{tpu_custom_call.1} parent=15 // pred_fallthru
        _
    $region16: #{tpu_custom_call.1} parent=5 // pred_fallthru
      _
    %p185 = scmp.le.s32.totalorder 1, %s10
    %p186 = scmp.lt.s32.totalorder %s10, 3
    %p187 = pnand %p185, %p186
    %p188 = pneg %p187
    // Predicated region
    $region25: #{tpu_custom_call.1} parent=5 // pred_check
      _
    $region26: #{tpu_custom_call.1} parent=5 // pred_check_branch
      %190 = sbr.rel (%p187) target = $region28
    $region27: #{tpu_custom_call.1} parent=5 // pred_region
      %s191 = ssub.s32 %s10, 1
      %p192 = scmp.lt.s32.totalorder %s20, 1
      %s193 = scalar_select %p192, %s20, 1
      %p194 = scmp.lt.s32.totalorder %s21, 0
      %s195 = scalar_select %p194, %s21, 0
      %p196 = scmp.lt.s32.totalorder %s22, 0
      %s197 = scalar_select %p196, %s22, 0
      %s198 = sadd.s32 %s197, %s195
      %s199 = sadd.s32 %s198, %s193
      %s200 = smul.addr %s199, 8
      %s201 = scalar_lea.vmem %s0, %s200
      %p202 = pneg %p59
      %p203 = pneg %p56
      %p204 = scmp.lt.s32.totalorder %s20, 1
      %s205 = scalar_select %p204, %s20, 1
      %p206 = scmp.lt.s32.totalorder %s21, 0
      %s207 = scalar_select %p206, %s21, 0
      %s208 = sadd.s32 %s207, %s205
      %s209 = smul.addr %s208, 8
      %s210 = scalar_lea.vmem %s1, %s209
      %p211 = pneg %p87
      %p212 = pneg %p84
      %p213 = pneg %p115
      %p214 = pneg %p112
      %s215 = sadd.s32 %s20, %s21
      %p216 = scmp.lt.s32.totalorder %s215, 1
      %s217 = scalar_select %p216, %s215, 1
      %s218 = scalar_lea.vmem %s2, %s217
      %p219 = pneg %p143
      %p220 = pneg %p140
      %s221 = sadd.s32 %s20, %s21
      %p222 = scmp.lt.s32.totalorder %s221, 1
      %s223 = scalar_select %p222, %s221, 1
      %s224 = scalar_lea.vmem %s3, %s223
      %p225 = scmp.lt.s32.totalorder %s20, 1
      %s226 = scalar_select %p225, %s20, 1
      %p227 = scmp.lt.s32.totalorder %s21, 0
      %s228 = scalar_select %p227, %s21, 0
      %p229 = scmp.lt.s32.totalorder %s22, 0
      %s230 = scalar_select %p229, %s22, 0
      %s231 = sadd.s32 %s230, %s228
      %s232 = sadd.s32 %s231, %s226
      %s233 = smul.addr %s232, 8
      %s234 = scalar_lea.vmem %s0, %s233
      %p235 = scmp.lt.s32.totalorder %s20, 1
      %s236 = scalar_select %p235, %s20, 1
      %p237 = scmp.lt.s32.totalorder %s21, 0
      %s238 = scalar_select %p237, %s21, 0
      %s239 = sadd.s32 %s238, %s236
      %s240 = smul.addr %s239, 8
      %s241 = scalar_lea.vmem %s1, %s240
      %s242 = sadd.s32 %s20, %s21
      %p243 = scmp.lt.s32.totalorder %s242, 1
      %s244 = scalar_select %p243, %s242, 1
      %s245 = scalar_lea.vmem %s2, %s244
      %s246 = sadd.s32 %s20, %s21
      %s247 = sadd.s32 %s20, %s21
      %p248 = scmp.lt.s32.totalorder %s247, 1
      %s249 = scalar_select %p248, %s247, 1
      %s250 = scalar_lea.vmem %s3, %s249
      %s251 = sadd.s32 %s20, %s21
      %p252 = scmp.eq.s32.totalorder %s22, 0
      // Predicated region
      $region29: #{tpu_custom_call.1} parent=27 // pred_check
        %p253 = pneg %p252
      $region30: #{tpu_custom_call.1} parent=27 // pred_check_branch
        %255 = sbr.rel (%p253) target = $region32
      $region31: #{tpu_custom_call.1} parent=27 // pred_region
        %vm256 = vcmask 7168
        %257 = vst.msk [vmem:[#allocation2] sm:$0xff] %vm256, -inf
        %258 = vst.msk [vmem:[#allocation3] sm:$0xff] %vm256, 0.0
        %259 = vst.msk [vmem:[#allocation4] sm:$0xff] %vm256, 0.0
      $region32: #{tpu_custom_call.1} parent=27 // pred_fallthru
        _
      %v260 = vld [vmem:[%s234] sm:$0xff]
      %v261 = vld [vmem:[%s241] sm:$0xff]
      %v262 = vlaneseq
      %v263 = vand.u32 %v262, 127
      %v264 = vld [vmem:[#allocation2] sm:$0xff]
      %vm265 = vcmask 261120
      %v266 = vsel %vm265, %v260, -inf
      %267 = vmax.xlane.f32.xlu0 %v266
      %v268 = vpop.xlane.xlu0 %267
      %v269 = vmax.f32 %v264, %v268
      %v270 = vld [vmem:[#allocation3] sm:$0xff]
      %v271 = vsub.f32 %v264, %v269
      %v272 = vmul.f32 %v271, 1.442695
      %v273 = vpow.pop %v272
      %v274 = vmul.f32 %v270, %v273
      %276 = vset.pattern.permute.xlu0 0
      %277 = vperm.xlu0 %276, %v269
      %v278 = vpop.permute.xlu0 %277
      %v280 = vsub.f32 %v260, %v278
      %v281 = vmul.f32 %v280, 1.442695
      %v282 = vpow.pop %v281
      %v283 = vsel %vm265, %v282, 0.0
      %284 = vadd.xlane.f32.xlu0 %v283
      %v285 = vpop.xlane.xlu0 %284
      %v286 = vadd.f32 %v274, %v285
      %vm287 = vcmask 7168
      %288 = vst.msk [vmem:[#allocation3] sm:$0xff] %vm287, %v286
      %289 = vst.msk [vmem:[#allocation2] sm:$0xff] %vm287, %v269
      %s290 = smul.u32 %s22, 32
      %v291 = vstv %s290
      %v292 = vsub.s32 %v261, %v291
      %v293 = vld [vmem:[#allocation4] sm:$0xff]
      %294 = vset.pattern.permute.xlu0 0
      %295 = vperm.xlu0 %294, %v292
      %v296 = vpop.permute.xlu0 %295
      %vm297 = vcmp.eq.s32.totalorder %v263, %v296
      %v298 = vsel %vm297, %v260, 0.0
      %v299 = vsel %vm265, %v298, 0.0
      %300 = vadd.xlane.f32.xlu0 %v299
      %v301 = vpop.xlane.xlu0 %300
      %v302 = vadd.f32 %v293, %v301
      %303 = vst.msk [vmem:[#allocation4] sm:$0xff] %vm287, %v302
      // Predicated region
      $region33: #{tpu_custom_call.1} parent=27 // pred_check
        %p304 = pneg %p252
      $region34: #{tpu_custom_call.1} parent=27 // pred_check_branch
        %306 = sbr.rel (%p304) target = $region36
      $region35: #{tpu_custom_call.1} parent=27 // pred_region
        %v307 = vld [vmem:[#allocation2] sm:$0xff]
        %v308 = vld [vmem:[#allocation3] sm:$0xff]
        %v309 = vlog2.pop %v308
        %v310 = vmul.f32 %v309, 0.6931472
        %v311 = vadd.f32 %v307, %v310
        %v312 = vld [vmem:[#allocation4] sm:$0xff]
        %v313 = vsub.f32 %v311, %v312
        %vm314 = vcmp.ne.s32.totalorder %v261, 0
        %v315 = vsel %vm314, %v313, 0.0
        %v316 = vsel %vm287, %v315, 0.0
        %317 = vadd.xlane.f32.xlu0 %v316
        %v318 = vpop.xlane.xlu0 %317
        %v319 = vrot.slane %v318, 4
        %v320 = vadd.f32 %v318, %v319
        %v321 = vrot.slane %v320, 2
        %v322 = vadd.f32 %v320, %v321
        %v323 = vrot.slane %v322, 1
        %v324 = vadd.f32 %v322, %v323
        %s325 = vtos %v324
        %v326 = vstv %s325
        %v327 = vadd.f32 %v326, 0.0
        %vm328 = vcmask 0
        %329 = vst.msk [vmem:[%s245] sm:$0x1] %vm328, %v327
        %v330 = vsel %vm314, 1, 0
        %v331 = vcvt.s32.f32 %v330
        %v332 = vsel %vm287, %v331, 0.0
        %333 = vadd.xlane.f32.xlu0 %v332
        %v334 = vpop.xlane.xlu0 %333
        %v335 = vrot.slane %v334, 4
        %v336 = vadd.f32 %v334, %v335
        %v337 = vrot.slane %v336, 2
        %v338 = vadd.f32 %v336, %v337
        %v339 = vrot.slane %v338, 1
        %v340 = vadd.f32 %v338, %v339
        %s341 = vtos %v340
        %v342 = vstv %s341
        %v343 = vadd.f32 %v342, 0.0
        %344 = vst.msk [vmem:[%s250] sm:$0x1] %vm328, %v343
      $region36: #{tpu_custom_call.1} parent=27 // pred_fallthru
        _
      %s345 = sadd.s32 %s20, %s21
      %p346 = scmp.lt.s32.totalorder %s345, 1
      %s347 = scalar_select %p346, %s345, 1
      %s348 = scalar_lea.vmem %s2, %s347
      %s349 = sadd.s32 %s20, %s21
      %p350 = scmp.lt.s32.totalorder %s349, 1
      %s351 = scalar_select %p350, %s349, 1
      %s352 = scalar_lea.vmem %s3, %s351
      // Predicated region
      $region37: #{tpu_custom_call.1} parent=27 // pred_check
        %p353 = pneg %p112
      $region38: #{tpu_custom_call.1} parent=27 // pred_check_branch
        %355 = sbr.rel (%p353) target = $region40
      $region39: #{tpu_custom_call.1} parent=27 // pred_region
        %s356 = sadd.s32 %s20, %s21
      $region40: #{tpu_custom_call.1} parent=27 // pred_fallthru
        _
      // Predicated region
      $region41: #{tpu_custom_call.1} parent=27 // pred_check
        %p357 = pneg %p140
      $region42: #{tpu_custom_call.1} parent=27 // pred_check_branch
        %359 = sbr.rel (%p357) target = $region44
      $region43: #{tpu_custom_call.1} parent=27 // pred_region
        %s360 = sadd.s32 %s20, %s21
      $region44: #{tpu_custom_call.1} parent=27 // pred_fallthru
        _
    $region28: #{tpu_custom_call.1} parent=5 // pred_fallthru
      _
    %p361 = scmp.le.s32.totalorder 2, %s10
    // Predicated region
    $region45: #{tpu_custom_call.1} parent=5 // pred_check
      %p362 = pneg %p361
    $region46: #{tpu_custom_call.1} parent=5 // pred_check_branch
      %364 = sbr.rel (%p362) target = $region48
    $region47: #{tpu_custom_call.1} parent=5 // pred_region
      %s365 = ssub.s32 %s10, 2
      // Predicated region
      $region49: #{tpu_custom_call.1} parent=47 // pred_check
        %p366 = pneg %p118
      $region50: #{tpu_custom_call.1} parent=47 // pred_check_branch
        %368 = sbr.rel (%p366) target = $region52
      $region51: #{tpu_custom_call.1} parent=47 // pred_region
        %s369 = sadd.s32 %s23, %s24
        %p370 = scmp.lt.s32.totalorder %s369, 1
        %s371 = scalar_select %p370, %s369, 1
        %s372 = scalar_lea.vmem %s2, %s371
      $region52: #{tpu_custom_call.1} parent=47 // pred_fallthru
        _
      // Predicated region
      $region53: #{tpu_custom_call.1} parent=47 // pred_check
        %p373 = pneg %p146
      $region54: #{tpu_custom_call.1} parent=47 // pred_check_branch
        %375 = sbr.rel (%p373) target = $region56
      $region55: #{tpu_custom_call.1} parent=47 // pred_region
        %s376 = sadd.s32 %s23, %s24
        %p377 = scmp.lt.s32.totalorder %s376, 1
        %s378 = scalar_select %p377, %s376, 1
        %s379 = scalar_lea.vmem %s3, %s378
      $region56: #{tpu_custom_call.1} parent=47 // pred_fallthru
        _
    $region48: #{tpu_custom_call.1} parent=5 // pred_fallthru
      _
  $region6: #{tpu_custom_call.1} parent=0 // loop_footer
    %s14 = sadd.s32 1, %s10
  $region7: #{tpu_custom_call.1} parent=0 // loop_footer_branch
    %9 = sbr.rel target = $region3
  $region8: #{tpu_custom_call.1} parent=0 // loop_exit
    _

</llo_original>
